<compile_context>
chip_gen: v5e
topology: v5e:2x2
jax: 0.10.0
libtpu: 0.0.40
codegen_flags: <defaults>
</compile_context>

<pallas_src>
import math

import jax
import jax.numpy as jnp
from jax.experimental import pallas as pl
from jax.experimental.pallas import tpu as pltpu

STATE_DIM = 6      # HIVPatient observation_space.shape[0]
N_ACTION = 4       # HIVPatient action_space.n
HIDDEN = (128, 128)

# Padded-to-sublane (8) dims used inside the kernel.
STATE_PAD = 8
ACTION_PAD = 8
_NEG_BIG = -1e30   # bias for padded action columns -> exp underflows to 0.


def _make_kernel(use_bf16_matmul):
    """Fused forward: 3 matmuls + 2 tanh + softmax in one kernel body."""
    if use_bf16_matmul:
        cast = lambda a: a.astype(jnp.bfloat16)   # bf16-native MXU on v6e/v7x
    else:
        cast = lambda a: a                        # exact f32 path (default)

    def kernel(x_ref, w1_ref, b1_ref, w2_ref, b2_ref, w3_ref, b3_ref, o_ref):
        x = x_ref[...]
        h = jnp.tanh(
            jnp.dot(cast(x), cast(w1_ref[...]),
                    preferred_element_type=jnp.float32) + b1_ref[...]
        )
        h = jnp.tanh(
            jnp.dot(cast(h), cast(w2_ref[...]),
                    preferred_element_type=jnp.float32) + b2_ref[...]
        )
        logits = (
            jnp.dot(cast(h), cast(w3_ref[...]),
                    preferred_element_type=jnp.float32) + b3_ref[...]
        )
        # softmax over the action axis (dim=1 in the PyTorch module). Padded
        # action columns carry a -1e30 bias, so exp() of them is exactly 0 and
        # they never affect max / sum / output.
        m = jnp.max(logits, axis=-1, keepdims=True)
        e = jnp.exp(logits - m)
        s = jnp.sum(e, axis=-1, keepdims=True)
        # EUP approximate reciprocal + one Newton-Raphson refinement: keeps the
        # divide off the VPU while matching exact softmax to <1e-7 relative.
        r = pl.reciprocal(s, approx=True)
        r = r * (2.0 - s * r)
        o_ref[...] = e * r

    return kernel


def _pick_batch_tile(B, max_tile=1024):
    """Tile size for the batch axis.

    B <= 64      : single grid step (no pipeline machinery, lowest latency).
    B  > 64      : >=2 grid steps, tiles of ~B/n_steps rounded up to 8 rows so
                   tiles are near-equal; step count rounded up to even so the
                   v7x megacore's two TensorCores get balanced work.
    """
    if B <= 64:
        return B
    n_steps = max(2, math.ceil(B / max_tile))
    if n_steps % 2:
        n_steps += 1
    rows = -(-B // n_steps)          # cdiv
    return ((rows + 7) // 8) * 8     # sublane-aligned


def discrete_policy_forward(x, params, *, max_batch_tile=1024,
                            use_bf16_matmul=False):
    """x: [B, STATE_DIM] float32 -> action probabilities [B, N_ACTION]."""
    w1, b1, w2, b2, w3, b3 = params
    B = x.shape[0]

    # One-time wrapper-side padding of the thin dims (pure layout plumbing):
    #   state 6 -> 8   : zero-pad x cols and w1 rows (zeros contribute nothing)
    #   action 4 -> 8  : zero-pad w3 cols; padded b3 entries = -1e30 so the
    #                    padded logits vanish under exp; output sliced after.
    xp = jnp.pad(x, ((0, 0), (0, STATE_PAD - STATE_DIM)))
    w1p = jnp.pad(w1, ((0, STATE_PAD - STATE_DIM), (0, 0)))
    w3p = jnp.pad(w3, ((0, 0), (0, ACTION_PAD - N_ACTION)))
    b3p = jnp.pad(b3, ((0, 0), (0, ACTION_PAD - N_ACTION)),
                  constant_values=_NEG_BIG)

    bt = _pick_batch_tile(B, max_batch_tile)
    grid = (pl.cdiv(B, bt),)

    # Weights/biases are ~70 KB total; keep full blocks resident (constant
    # index maps -> DMA'd once), tile only the batch dimension.
    full = lambda shp: pl.BlockSpec(shp, lambda i: (0, 0))

    flops = 2 * B * (STATE_PAD * HIDDEN[0]
                     + HIDDEN[0] * HIDDEN[1]
                     + HIDDEN[1] * ACTION_PAD)
    transcendentals = B * (HIDDEN[0] + HIDDEN[1] + ACTION_PAD)  # tanh, tanh, exp
    weight_bytes = 4 * (STATE_PAD * HIDDEN[0] + HIDDEN[0]
                        + HIDDEN[0] * HIDDEN[1] + HIDDEN[1]
                        + HIDDEN[1] * ACTION_PAD + ACTION_PAD)
    bytes_accessed = 4 * B * (STATE_PAD + ACTION_PAD) + weight_bytes

    out = pl.pallas_call(
        _make_kernel(use_bf16_matmul),
        out_shape=jax.ShapeDtypeStruct((B, ACTION_PAD), jnp.float32),
        grid_spec=pl.GridSpec(
            grid=grid,
            in_specs=[
                pl.BlockSpec((bt, STATE_PAD), lambda i: (i, 0)),
                full(w1p.shape),
                full(b1.shape),
                full(w2.shape),
                full(b2.shape),
                full(w3p.shape),
                full(b3p.shape),
            ],
            out_specs=pl.BlockSpec((bt, ACTION_PAD), lambda i: (i, 0)),
        ),
        compiler_params=pltpu.CompilerParams(
            dimension_semantics=("parallel",)
        ),
        cost_estimate=pl.CostEstimate(
            flops=flops,
            transcendentals=transcendentals,
            bytes_accessed=bytes_accessed,
        ),
    )(xp, w1p, b1, w2, b2, w3p, b3p)

    # Drop the zero-probability padded action columns.
    return out[:, :N_ACTION]


def init_params(key):
    """Deterministic parameter init mirroring the module's shapes.

    PyTorch Linear weight is [out, in]; we store the transpose [in, out].
    The action head weight is scaled by 0.1 and its bias zeroed, as in __init__.
    """
    k1, k2, k3, k4, k5 = jax.random.split(key, 5)

    def uniform(k, shape, fan_in):
        bound = 1.0 / jnp.sqrt(float(fan_in))
        return jax.random.uniform(k, shape, jnp.float32, -bound, bound)

    w1 = uniform(k1, (STATE_DIM, HIDDEN[0]), STATE_DIM)
    b1 = uniform(k2, (1, HIDDEN[0]), STATE_DIM)
    w2 = uniform(k3, (HIDDEN[0], HIDDEN[1]), HIDDEN[0])
    b2 = uniform(k4, (1, HIDDEN[1]), HIDDEN[0])
    w3 = uniform(k5, (HIDDEN[1], N_ACTION), HIDDEN[1]) * 0.1  # .weight.data.mul_(0.1)
    b3 = jnp.zeros((1, N_ACTION), jnp.float32)                # .bias.data.mul_(0.0)
    return (w1, b1, w2, b2, w3, b3)


def _reference_forward(x, params):
    w1, b1, w2, b2, w3, b3 = params
    h = jnp.tanh(x @ w1 + b1)
    h = jnp.tanh(h @ w2 + b2)
    logits = h @ w3 + b3
    return jax.nn.softmax(logits, axis=1)


if __name__ == "__main__":
    key = jax.random.PRNGKey(0)
    pkey, xkey_small, xkey_big = jax.random.split(key, 3)
    params = init_params(pkey)

    # 1) Small inference batch (single grid step, latency path).
    B_small = 8
    x_small = jax.random.normal(xkey_small, (B_small, STATE_DIM), jnp.float32)
    probs = jax.block_until_ready(discrete_policy_forward(x_small, params))
    ref = _reference_forward(x_small, params)
    assert probs.shape == (B_small, N_ACTION)
    assert jnp.allclose(jnp.sum(probs, axis=1), 1.0, atol=1e-5)
    assert jnp.allclose(probs, ref, atol=1e-5, rtol=1e-5)

    # 2) Rollout-sized batch with B not a multiple of the tile: balanced tiles
    #    (152 + 148 rows) across 2 grid steps, so both v7x TensorCores work.
    B_big = 300
    x_big = jax.random.normal(xkey_big, (B_big, STATE_DIM), jnp.float32)
    probs_big = jax.block_until_ready(discrete_policy_forward(x_big, params))
    ref_big = _reference_forward(x_big, params)
    assert probs_big.shape == (B_big, N_ACTION)
    assert jnp.allclose(jnp.sum(probs_big, axis=1), 1.0, atol=1e-5)
    assert jnp.allclose(probs_big, ref_big, atol=1e-5, rtol=1e-5)

    print("KERNEL_OK")
</pallas_src>

<mosaic_0001>
module attributes {stable_mosaic.version = 11 : i64} {
  func.func @kernel(%arg0: i32, %arg1: memref<8x8xf32, #tpu.memory_space<vmem>>, %arg2: memref<8x128xf32, #tpu.memory_space<vmem>>, %arg3: memref<1x128xf32, #tpu.memory_space<vmem>>, %arg4: memref<128x128xf32, #tpu.memory_space<vmem>>, %arg5: memref<1x128xf32, #tpu.memory_space<vmem>>, %arg6: memref<128x8xf32, #tpu.memory_space<vmem>>, %arg7: memref<1x8xf32, #tpu.memory_space<vmem>>, %arg8: memref<8x8xf32, #tpu.memory_space<vmem>>) attributes {dimension_semantics = [#tpu.dimension_semantics<parallel>], iteration_bounds = array<i64: 1>, scalar_prefetch = 0 : i64, scratch_operands = 0 : i64, tpu.core_type = #tpu.core_type<tc>, window_params = [{transform_indices = @transform_0, window_bounds = array<i64: 8, 8>}, {pipeline_mode = #tpu.pipeline_mode<synchronous>, transform_indices = @transform_1, window_bounds = array<i64: 8, 128>}, {pipeline_mode = #tpu.pipeline_mode<synchronous>, transform_indices = @transform_2, window_bounds = array<i64: 1, 128>}, {pipeline_mode = #tpu.pipeline_mode<synchronous>, transform_indices = @transform_3, window_bounds = array<i64: 128, 128>}, {pipeline_mode = #tpu.pipeline_mode<synchronous>, transform_indices = @transform_4, window_bounds = array<i64: 1, 128>}, {pipeline_mode = #tpu.pipeline_mode<synchronous>, transform_indices = @transform_5, window_bounds = array<i64: 128, 8>}, {pipeline_mode = #tpu.pipeline_mode<synchronous>, transform_indices = @transform_6, window_bounds = array<i64: 1, 8>}, {transform_indices = @transform_7, window_bounds = array<i64: 8, 8>}]} {
    %c0 = arith.constant 0 : index
    %c0_0 = arith.constant 0 : index
    %0 = vector.load %arg1[%c0, %c0_0] : memref<8x8xf32, #tpu.memory_space<vmem>>, vector<8x8xf32>
    %c0_1 = arith.constant 0 : index
    %c0_2 = arith.constant 0 : index
    %1 = vector.load %arg2[%c0_1, %c0_2] : memref<8x128xf32, #tpu.memory_space<vmem>>, vector<8x128xf32>
    %cst = arith.constant dense<0.000000e+00> : vector<8x128xf32>
    %2 = tpu.matmul %0, %1, %cst {dimension_numbers = #tpu.dot_dimension_numbers<[1], [0], [0], [1], [0, 0, 1, 1], [], []>} : vector<8x8xf32>, vector<8x128xf32>, vector<8x128xf32> -> vector<8x128xf32>
    %c0_3 = arith.constant 0 : index
    %c0_4 = arith.constant 0 : index
    %3 = vector.load %arg3[%c0_3, %c0_4] : memref<1x128xf32, #tpu.memory_space<vmem>>, vector<1x128xf32>
    %4 = vector.broadcast %3 : vector<1x128xf32> to vector<8x128xf32>
    %5 = arith.addf %2, %4 : vector<8x128xf32>
    %6 = math.tanh %5 : vector<8x128xf32>
    %c0_5 = arith.constant 0 : index
    %c0_6 = arith.constant 0 : index
    %7 = vector.load %arg4[%c0_5, %c0_6] : memref<128x128xf32, #tpu.memory_space<vmem>>, vector<128x128xf32>
    %cst_7 = arith.constant dense<0.000000e+00> : vector<8x128xf32>
    %8 = tpu.matmul %6, %7, %cst_7 {dimension_numbers = #tpu.dot_dimension_numbers<[1], [0], [0], [1], [0, 0, 1, 1], [], []>} : vector<8x128xf32>, vector<128x128xf32>, vector<8x128xf32> -> vector<8x128xf32>
    %c0_8 = arith.constant 0 : index
    %c0_9 = arith.constant 0 : index
    %9 = vector.load %arg5[%c0_8, %c0_9] : memref<1x128xf32, #tpu.memory_space<vmem>>, vector<1x128xf32>
    %10 = vector.broadcast %9 : vector<1x128xf32> to vector<8x128xf32>
    %11 = arith.addf %8, %10 : vector<8x128xf32>
    %12 = math.tanh %11 : vector<8x128xf32>
    %c0_10 = arith.constant 0 : index
    %c0_11 = arith.constant 0 : index
    %13 = vector.load %arg6[%c0_10, %c0_11] : memref<128x8xf32, #tpu.memory_space<vmem>>, vector<128x8xf32>
    %cst_12 = arith.constant dense<0.000000e+00> : vector<8x8xf32>
    %14 = tpu.matmul %12, %13, %cst_12 {dimension_numbers = #tpu.dot_dimension_numbers<[1], [0], [0], [1], [0, 0, 1, 1], [], []>} : vector<8x128xf32>, vector<128x8xf32>, vector<8x8xf32> -> vector<8x8xf32>
    %c0_13 = arith.constant 0 : index
    %c0_14 = arith.constant 0 : index
    %15 = vector.load %arg7[%c0_13, %c0_14] : memref<1x8xf32, #tpu.memory_space<vmem>>, vector<1x8xf32>
    %16 = vector.broadcast %15 : vector<1x8xf32> to vector<8x8xf32>
    %17 = arith.addf %14, %16 : vector<8x8xf32>
    %cst_15 = arith.constant dense<0xFF800000> : vector<8xf32>
    %18 = vector.multi_reduction <maximumf>, %17, %cst_15 [1] : vector<8x8xf32> to vector<8xf32>
    %19 = vector.shape_cast %18 : vector<8xf32> to vector<8x1xf32>
    %20 = vector.broadcast %19 : vector<8x1xf32> to vector<8x8xf32>
    %21 = arith.subf %17, %20 : vector<8x8xf32>
    %22 = math.exp %21 : vector<8x8xf32>
    %cst_16 = arith.constant dense<0.000000e+00> : vector<8xf32>
    %23 = vector.multi_reduction <add>, %22, %cst_16 [1] : vector<8x8xf32> to vector<8xf32>
    %24 = vector.shape_cast %23 : vector<8xf32> to vector<8x1xf32>
    %25 = tpu.reciprocal %24 {approx = true} : vector<8x1xf32> -> vector<8x1xf32>
    %26 = arith.mulf %24, %25 : vector<8x1xf32>
    %cst_17 = arith.constant 2.000000e+00 : f32
    %27 = vector.broadcast %cst_17 : f32 to vector<8x1xf32>
    %28 = arith.subf %27, %26 : vector<8x1xf32>
    %29 = arith.mulf %25, %28 : vector<8x1xf32>
    %30 = vector.broadcast %29 : vector<8x1xf32> to vector<8x8xf32>
    %31 = arith.mulf %22, %30 : vector<8x8xf32>
    %c0_18 = arith.constant 0 : index
    %c0_19 = arith.constant 0 : index
    %32 = vector.load %arg8[%c0_18, %c0_19] : memref<8x8xf32, #tpu.memory_space<vmem>>, vector<8x8xf32>
    tpu.vector_store %arg8[%c0_18, %c0_19], %31 {strides = array<i32>} : memref<8x8xf32, #tpu.memory_space<vmem>>, vector<8x8xf32>,
    return
  }
  func.func @transform_0(%arg0: i32) -> (i32, i32) {
    %c0_i32 = arith.constant 0 : i32
    %c0_i32_0 = arith.constant 0 : i32
    return %arg0, %c0_i32 : i32, i32
  }
  func.func @transform_1(%arg0: i32) -> (i32, i32) {
    %c0_i32 = arith.constant 0 : i32
    %c0_i32_0 = arith.constant 0 : i32
    %c0_i32_1 = arith.constant 0 : i32
    return %c0_i32, %c0_i32_0 : i32, i32
  }
  func.func @transform_2(%arg0: i32) -> (i32, i32) {
    %c0_i32 = arith.constant 0 : i32
    %c0_i32_0 = arith.constant 0 : i32
    %c0_i32_1 = arith.constant 0 : i32
    return %c0_i32, %c0_i32_0 : i32, i32
  }
  func.func @transform_3(%arg0: i32) -> (i32, i32) {
    %c0_i32 = arith.constant 0 : i32
    %c0_i32_0 = arith.constant 0 : i32
    %c0_i32_1 = arith.constant 0 : i32
    return %c0_i32, %c0_i32_0 : i32, i32
  }
  func.func @transform_4(%arg0: i32) -> (i32, i32) {
    %c0_i32 = arith.constant 0 : i32
    %c0_i32_0 = arith.constant 0 : i32
    %c0_i32_1 = arith.constant 0 : i32
    return %c0_i32, %c0_i32_0 : i32, i32
  }
  func.func @transform_5(%arg0: i32) -> (i32, i32) {
    %c0_i32 = arith.constant 0 : i32
    %c0_i32_0 = arith.constant 0 : i32
    %c0_i32_1 = arith.constant 0 : i32
    return %c0_i32, %c0_i32_0 : i32, i32
  }
  func.func @transform_6(%arg0: i32) -> (i32, i32) {
    %c0_i32 = arith.constant 0 : i32
    %c0_i32_0 = arith.constant 0 : i32
    %c0_i32_1 = arith.constant 0 : i32
    return %c0_i32, %c0_i32_0 : i32, i32
  }
  func.func @transform_7(%arg0: i32) -> (i32, i32) {
    %c0_i32 = arith.constant 0 : i32
    %c0_i32_0 = arith.constant 0 : i32
    return %arg0, %c0_i32 : i32, i32
  }
}

</mosaic_0001>

<llo_original>
// kernel: tpu_custom_call.1
$region0: #{tpu_custom_call.1}
  #allocation0 [shape = 'u32[]', space=smem, size = 0x4, offset = 0x4, fixed_abs, tag = 'smem constant byte address 0x4 - core index']
  #allocation1 [shape = 'u32[72,128]{1,0:T(1,128)}', space=vmem, size = 0x9000, scoped, tag = 'internal scratch']
  %s0 = inlined_call_operand.vmem [shape: f32[8,8], index: 0, kind: input, shape index: {}]
  %s1 = inlined_call_operand.hbm [shape: f32[8,128], index: 1, kind: input, shape index: {}]
  %s2 = inlined_call_operand.vmem [shape: f32[1,128], index: 2, kind: input, shape index: {}]
  %s3 = inlined_call_operand.vmem [shape: f32[128,128], index: 3, kind: input, shape index: {}]
  %s4 = inlined_call_operand.vmem [shape: f32[1,128], index: 4, kind: input, shape index: {}]
  %s5 = inlined_call_operand.vmem [shape: f32[128,8], index: 5, kind: input, shape index: {}]
  %s6 = inlined_call_operand.vmem [shape: f32[1,8], index: 6, kind: input, shape index: {}]
  %s7 = inlined_call_operand.hbm [shape: f32[8,8], index: 7, kind: output, shape index: {}]
  %s8 = sld [smem:[#allocation0]]
  $region42: #{tpu_custom_call.1} parent=0
    _
  %s10 = ssub.s32 1, %s8
  %s11 = scalar_select 0, %s10, %s8
  $region1: #{tpu_custom_call.1} parent=0
    #allocation2 [shape = 'u8[4096]{0}', space=vmem, size = 0x1000, scoped, tag = 'input window, operand 1, single buffered']
    #allocation3 [shape = 's32[1]{0}', space=sflag, size = 0x4, scoped, tag = 'scoped memory for tpu_custom_call.1']
    #allocation4 [shape = 's32[1]{0}', space=sflag, size = 0x4, scoped, tag = 'scoped memory for tpu_custom_call.1']
    #allocation5 [shape = 'u8[4096]{0}', space=vmem, size = 0x1000, scoped, tag = 'output window, operand 0, single buffered']
    %12 = vsyncpa [#allocation3], 0
    %13 = vsyncpa [#allocation4], 0
    // Predicated region
    $region2: #{tpu_custom_call.1} parent=1 // pred_check
      _
    $region3: #{tpu_custom_call.1} parent=1 // pred_check_branch
      %15 = sbr.rel (0) target = $region5
    $region4: #{tpu_custom_call.1} parent=1 // pred_region
      _
    $region5: #{tpu_custom_call.1} parent=1 // pred_fallthru
      _
    // Predicated region
    $region6: #{tpu_custom_call.1} parent=1 // pred_check
      _
    $region7: #{tpu_custom_call.1} parent=1 // pred_check_branch
      %17 = sbr.rel (0) target = $region9
    $region8: #{tpu_custom_call.1} parent=1 // pred_region
      %19 = vsyncadd [#allocation3], 0
      %s21 = sshll.u32 %s1, 4
      %s22 = int_to_ptr.hbm [resolvable:$true] %s21
      %s23 = sshll.u32 [#allocation2], 4
      %s24 = int_to_ptr.vmem [resolvable:$true] %s23
      %26 = dma.hbm_to_vmem [thread:$0]  %s22, 128, %s24, [#allocation3]
    $region9: #{tpu_custom_call.1} parent=1 // pred_fallthru
      _
    // Predicated region
    $region10: #{tpu_custom_call.1} parent=1 // pred_check
      _
    $region11: #{tpu_custom_call.1} parent=1 // pred_check_branch
      %28 = sbr.rel (0) target = $region13
    $region12: #{tpu_custom_call.1} parent=1 // pred_region
      _
    $region13: #{tpu_custom_call.1} parent=1 // pred_fallthru
      _
    // Predicated region
    $region14: #{tpu_custom_call.1} parent=1 // pred_check
      _
    $region15: #{tpu_custom_call.1} parent=1 // pred_check_branch
      %30 = sbr.rel (0) target = $region17
    $region16: #{tpu_custom_call.1} parent=1 // pred_region
      _
    $region17: #{tpu_custom_call.1} parent=1 // pred_fallthru
      _
    // Predicated region
    $region18: #{tpu_custom_call.1} parent=1 // pred_check
      _
    $region19: #{tpu_custom_call.1} parent=1 // pred_check_branch
      %32 = sbr.rel (0) target = $region21
    $region20: #{tpu_custom_call.1} parent=1 // pred_region
      _
    $region21: #{tpu_custom_call.1} parent=1 // pred_fallthru
      _
    // Predicated region
    $region22: #{tpu_custom_call.1} parent=1 // pred_check
      _
    $region23: #{tpu_custom_call.1} parent=1 // pred_check_branch
      %34 = sbr.rel (0) target = $region25
    $region24: #{tpu_custom_call.1} parent=1 // pred_region
      _
    $region25: #{tpu_custom_call.1} parent=1 // pred_fallthru
      _
    // Predicated region
    $region26: #{tpu_custom_call.1} parent=1 // pred_check
      _
    $region27: #{tpu_custom_call.1} parent=1 // pred_check_branch
      %36 = sbr.rel (0) target = $region29
    $region28: #{tpu_custom_call.1} parent=1 // pred_region
      _
    $region29: #{tpu_custom_call.1} parent=1 // pred_fallthru
      _
    // Predicated region
    $region30: #{tpu_custom_call.1} parent=1 // pred_check
      _
    $region31: #{tpu_custom_call.1} parent=1 // pred_check_branch
      %38 = sbr.rel (0) target = $region33
    $region32: #{tpu_custom_call.1} parent=1 // pred_region
      %40 = dma.done [#allocation3], 128
    $region33: #{tpu_custom_call.1} parent=1 // pred_fallthru
      _
    %v41 = vld [vmem:[%s0] sm:$0xff]
    %v42 = vld [vmem:[#allocation2] sm:$0xff]
    %v43 = vld [vmem:[%s2] sm:$0x1]
    %v45 = vperm.slane %v43, 0
    %vm47 = vcmask 64512
    %v49 = vsel %vm47, %v41, 0
    %51 = vmatpush.msra.mxu0 0.0
    %52 = vmatpush.msra.mxu0 0.0
    %53 = vmatpush.msra.mxu0 0.0
    %54 = vmatpush.msra.mxu0 0.0
    %55 = vmatpush.msra.mxu0 0.0
    %56 = vmatpush.msra.mxu0 0.0
    %57 = vmatpush.msra.mxu0 0.0
    %58 = vmatpush.msra.mxu0 0.0
    %59 = vmatpush.msra.mxu0 0.0
    %60 = vmatpush.msra.mxu0 0.0
    %61 = vmatpush.msra.mxu0 0.0
    %62 = vmatpush.msra.mxu0 0.0
    %63 = vmatpush.msra.mxu0 0.0
    %64 = vmatpush.msra.mxu0 0.0
    %65 = vmatpush.msra.mxu0 0.0
    %66 = vmatpush.msra.mxu0 %v42
    %67 = vmatmul.f32.gmra.mxu0 %v49
    %v68 = vpop.f32.mrf.mxu0
    %v69 = vadd.f32 %v45, %v68
    %70 = vdwg.mxu0
    %v71 = vtanh.pop %v69
    %v72 = vld [vmem:[%s3] sm:$0xff]
    %v73 = vld [vmem:[%s3 + $0x8] sm:$0xff]
    %v74 = vld [vmem:[%s3 + $0x10] sm:$0xff]
    %v75 = vld [vmem:[%s3 + $0x18] sm:$0xff]
    %v76 = vld [vmem:[%s3 + $0x20] sm:$0xff]
    %v77 = vld [vmem:[%s3 + $0x28] sm:$0xff]
    %v78 = vld [vmem:[%s3 + $0x30] sm:$0xff]
    %v79 = vld [vmem:[%s3 + $0x38] sm:$0xff]
    %v80 = vld [vmem:[%s3 + $0x40] sm:$0xff]
    %v81 = vld [vmem:[%s3 + $0x48] sm:$0xff]
    %v82 = vld [vmem:[%s3 + $0x50] sm:$0xff]
    %v83 = vld [vmem:[%s3 + $0x58] sm:$0xff]
    %v84 = vld [vmem:[%s3 + $0x60] sm:$0xff]
    %v85 = vld [vmem:[%s3 + $0x68] sm:$0xff]
    %v86 = vld [vmem:[%s3 + $0x70] sm:$0xff]
    %v87 = vld [vmem:[%s3 + $0x78] sm:$0xff]
    %v88 = vld [vmem:[%s4] sm:$0x1]
    %v90 = vperm.slane %v88, 0
    %92 = vmatpush.msra.mxu0 %v87
    %93 = vmatpush.msra.mxu0 %v86
    %94 = vmatpush.msra.mxu0 %v85
    %95 = vmatpush.msra.mxu0 %v84
    %96 = vmatpush.msra.mxu0 %v83
    %97 = vmatpush.msra.mxu0 %v82
    %98 = vmatpush.msra.mxu0 %v81
    %99 = vmatpush.msra.mxu0 %v80
    %100 = vmatpush.msra.mxu0 %v79
    %101 = vmatpush.msra.mxu0 %v78
    %102 = vmatpush.msra.mxu0 %v77
    %103 = vmatpush.msra.mxu0 %v76
    %104 = vmatpush.msra.mxu0 %v75
    %105 = vmatpush.msra.mxu0 %v74
    %106 = vmatpush.msra.mxu0 %v73
    %107 = vmatpush.msra.mxu0 %v72
    %108 = vmatmul.f32.gmra.mxu0 %v71
    %v109 = vpop.f32.mrf.mxu0
    %v110 = vadd.f32 %v90, %v109
    %111 = vdwg.mxu0
    %v112 = vtanh.pop %v110
    %v113 = vld [vmem:[%s5] sm:$0xff]
    %v114 = vld [vmem:[%s5 + $0x8] sm:$0xff]
    %v115 = vld [vmem:[%s5 + $0x10] sm:$0xff]
    %v116 = vld [vmem:[%s5 + $0x18] sm:$0xff]
    %v117 = vld [vmem:[%s5 + $0x20] sm:$0xff]
    %v118 = vld [vmem:[%s5 + $0x28] sm:$0xff]
    %v119 = vld [vmem:[%s5 + $0x30] sm:$0xff]
    %v120 = vld [vmem:[%s5 + $0x38] sm:$0xff]
    %v121 = vld [vmem:[%s5 + $0x40] sm:$0xff]
    %v122 = vld [vmem:[%s5 + $0x48] sm:$0xff]
    %v123 = vld [vmem:[%s5 + $0x50] sm:$0xff]
    %v124 = vld [vmem:[%s5 + $0x58] sm:$0xff]
    %v125 = vld [vmem:[%s5 + $0x60] sm:$0xff]
    %v126 = vld [vmem:[%s5 + $0x68] sm:$0xff]
    %v127 = vld [vmem:[%s5 + $0x70] sm:$0xff]
    %v128 = vld [vmem:[%s5 + $0x78] sm:$0xff]
    %v129 = vld [vmem:[%s6] sm:$0x1]
    %v131 = vperm.slane %v129, 0
    %133 = vmatpush.msra.mxu0 %v128
    %134 = vmatpush.msra.mxu0 %v127
    %135 = vmatpush.msra.mxu0 %v126
    %136 = vmatpush.msra.mxu0 %v125
    %137 = vmatpush.msra.mxu0 %v124
    %138 = vmatpush.msra.mxu0 %v123
    %139 = vmatpush.msra.mxu0 %v122
    %140 = vmatpush.msra.mxu0 %v121
    %141 = vmatpush.msra.mxu0 %v120
    %142 = vmatpush.msra.mxu0 %v119
    %143 = vmatpush.msra.mxu0 %v118
    %144 = vmatpush.msra.mxu0 %v117
    %145 = vmatpush.msra.mxu0 %v116
    %146 = vmatpush.msra.mxu0 %v115
    %147 = vmatpush.msra.mxu0 %v114
    %148 = vmatpush.msra.mxu0 %v113
    %149 = vmatmul.f32.gmra.mxu0 %v112
    %v150 = vpop.f32.mrf.mxu0
    %v151 = vadd.f32 %v131, %v150
    %152 = vdwg.mxu0
    %v153 = vsel %vm47, %v151, -inf
    %154 = vmax.xlane.f32.xlu0 %v153
    %v155 = vpop.xlane.xlu0 %154
    %v156 = vsub.f32 %v151, %v155
    %v157 = vmul.f32 %v156, 1.442695
    %v158 = vpow.pop %v157
    %v159 = vsel %vm47, %v158, 0.0
    %160 = vadd.xlane.f32.xlu0 %v159
    %v161 = vpop.xlane.xlu0 %160
    %v162 = vrcp.pop %v161
    %v163 = vmul.f32 %v161, %v162
    %v164 = vsub.f32 2.0, %v163
    %v165 = vmul.f32 %v162, %v164
    %v166 = vmul.f32 %v158, %v165
    %167 = vst.msk [vmem:[#allocation5] sm:$0xff] %vm47, %v166
    // Predicated region
    $region34: #{tpu_custom_call.1} parent=1 // pred_check
      _
    $region35: #{tpu_custom_call.1} parent=1 // pred_check_branch
      %169 = sbr.rel (0) target = $region37
    $region36: #{tpu_custom_call.1} parent=1 // pred_region
      %171 = vsyncadd [#allocation4], 0
      %s173 = sshll.u32 [#allocation5], 4
      %s174 = int_to_ptr.vmem [resolvable:$true] %s173
      %s175 = sshll.u32 %s7, 4
      %s176 = int_to_ptr.hbm [resolvable:$true] %s175
      %178 = dma.vmem_to_hbm [thread:$0]  %s174, 128, %s176, [#allocation4]
    $region37: #{tpu_custom_call.1} parent=1 // pred_fallthru
      _
    // Predicated region
    $region38: #{tpu_custom_call.1} parent=1 // pred_check
      _
    $region39: #{tpu_custom_call.1} parent=1 // pred_check_branch
      %180 = sbr.rel (0) target = $region41
    $region40: #{tpu_custom_call.1} parent=1 // pred_region
      %182 = dma.done [#allocation4], 128
    $region41: #{tpu_custom_call.1} parent=1 // pred_fallthru
      _
    %183 = vsyncpa [#allocation3], 1
    %184 = vsyncpa [#allocation4], 1

</llo_original>
